<compile_context>
chip_gen: v6e
topology: v6e:2x2x1
jax: 0.10.0
libtpu: 0.0.40
codegen_flags: <defaults>
</compile_context>

<pallas_src>
import functools

import jax
import jax.numpy as jnp
from jax.experimental import pallas as pl
from jax.experimental.pallas import tpu as pltpu


def _round_up(x, m):
    return ((x + m - 1) // m) * m


def _vmem_capacity_bytes():
    try:
        return int(pltpu.get_tpu_info().vmem_capacity_bytes)
    except Exception:
        return 64 * 1024 * 1024        # conservative (v7x-sized) fallback


def _choose_tiling(N, C, hw, x_itemsize, EMB_pad, NC_pad, w_itemsize,
                   vmem_limit, tile_n=None, hw_block=None):
    """Pick (tile_n, N_pad, hw_block, hw_pad) so the working set fits VMEM."""
    slack = 2 * 1024 * 1024
    # Weights counted double-buffered (constant index maps still get 2 buffers).
    w_bytes = 2 * w_itemsize * (C * EMB_pad + EMB_pad + EMB_pad * NC_pad + NC_pad)
    avail = max(vmem_limit - slack - w_bytes, 1 << 20)

    def fits(tn, hwb):
        out_b = 2 * tn * (EMB_pad + NC_pad) * 4            # double-buffered outputs
        acc_b = tn * C * 4                                  # pooled-sum scratch
        x_b = tn * C * hwb * (2 * x_itemsize + 4)           # 2x input buf + f32 reduce temp
        return out_b + acc_b + x_b <= avail

    tn_probe = N if N < 8 else 8

    # --- spatial (reduction) axis -------------------------------------------
    if hw_block is None:
        if fits(tn_probe, hw):
            hw_block = hw                                   # full rows, no hw padding
        else:
            # Large feature map: tile the reduction axis in multiples of 128.
            # (If even 128 doesn't fit the budget we proceed anyway.)
            hw_block = 128
            while hw_block * 2 <= _round_up(hw, 128) and fits(tn_probe, hw_block * 2):
                hw_block *= 2
    if hw_block != hw:
        hw_block = max(128, _round_up(hw_block, 128))
        hw_block = min(hw_block, _round_up(hw, 128))
    hw_pad = _round_up(hw, hw_block)

    # --- batch axis -----------------------------------------------------------
    if tile_n is None:
        if fits(N, hw_block):
            tile_n = N                                      # whole batch: no padding copy
        else:
            N8 = _round_up(N, 8)
            max_tn = 8
            while max_tn + 8 <= N8 and fits(max_tn + 8, hw_block):
                max_tn += 8
            # Balance padding waste against per-grid-step overhead (~a few rows).
            best_t, best_score = 8, None
            for cand in range(8, max_tn + 1, 8):
                score = _round_up(N, cand) * (1.0 + 16.0 / cand)
                if best_score is None or score < best_score:
                    best_t, best_score = cand, score
            tile_n = best_t
    if tile_n != N and tile_n % 8 != 0:
        tile_n = _round_up(tile_n, 8)
    if tile_n != N:
        tile_n = min(tile_n, _round_up(N, 8))
    N_pad = N if tile_n == N else _round_up(N, tile_n)
    return tile_n, N_pad, hw_block, hw_pad


def _head_kernel(x_ref, w1_ref, b1_ref, w2_ref, b2_ref,
                 feat_ref, out_ref, acc_ref, *, compute_dtype):
    # x_ref: (tile_n, C, hw_block) in the input dtype, spatial axis on lanes.
    j = pl.program_id(1)

    @pl.when(j == 0)
    def _():
        acc_ref[...] = jnp.zeros_like(acc_ref)

    # f32 accumulation of the spatial sum without materialising an explicit
    # full-tile f32 copy (v5e has no bf16 VPU; precision stays f32).
    acc_ref[...] += jnp.sum(x_ref[...], axis=-1, dtype=jnp.float32)

    @pl.when(j == pl.num_programs(1) - 1)
    def _():
        pooled = acc_ref[...].astype(compute_dtype)         # (tile_n, C); 1/HW folded into w1
        h = jnp.dot(pooled, w1_ref[...], preferred_element_type=jnp.float32)
        feature = jnp.maximum(h + b1_ref[...], 0.0)          # f32, (tile_n, EMB_pad)
        feat_ref[...] = feature
        out_ref[...] = (jnp.dot(feature.astype(compute_dtype), w2_ref[...],
                                preferred_element_type=jnp.float32)
                        + b2_ref[...])                       # (tile_n, NC_pad)


def net_forward(x_nchw, w1, b1, w2, b2, *, tile_n=None, hw_block=None):
    """classifier(x) for the backbone feature map.

    x_nchw: (N, C, H, W) (f32 or bf16).  w1: (emb, C), b1: (emb,),
    w2: (num_classes, emb), b2: (num_classes,)  — PyTorch nn.Linear layout.
    Returns (feature (N, emb), out (N, num_classes)) as float32.
    """
    N, C, H, W = x_nchw.shape
    emb = w1.shape[0]
    nc = w2.shape[0]
    hw = H * W

    EMB_pad = _round_up(emb, 128)
    NC_pad = _round_up(nc, 128)

    x_itemsize = jnp.dtype(x_nchw.dtype).itemsize
    # bf16 backbone output -> bf16 MXU weights (half the weight DMA / VMEM);
    # f32 input keeps f32 weights to preserve train/eval numerics.
    compute_dtype = jnp.bfloat16 if x_nchw.dtype == jnp.bfloat16 else jnp.float32
    w_itemsize = jnp.dtype(compute_dtype).itemsize

    vmem_cap = _vmem_capacity_bytes()
    vmem_limit = max(32 * 1024 * 1024,
                     min(int(vmem_cap * 3 // 4), 96 * 1024 * 1024))

    tile_n, N_pad, hw_block, hw_pad = _choose_tiling(
        N, C, hw, x_itemsize, EMB_pad, NC_pad, w_itemsize, vmem_limit,
        tile_n=tile_n, hw_block=hw_block)

    # Native-layout stream: (N, C, H*W) is a free reshape of NCHW.  Padding (and
    # the extra HBM copy it implies) happens only when tiling actually needs it.
    x3 = x_nchw.reshape(N, C, hw)
    if N_pad != N or hw_pad != hw:
        x3 = jnp.pad(x3, ((0, N_pad - N), (0, 0), (0, hw_pad - hw)))

    f32 = jnp.float32
    inv_hw = 1.0 / float(hw)
    # 1/(H*W) folded into w1 (mean -> sum); emb / num_classes padded to 128 for
    # lane-dense matmuls and unmasked output stores.  Streamed C is NOT padded.
    w1_t = jnp.zeros((C, EMB_pad), f32).at[:, :emb].set(
        jnp.transpose(w1).astype(f32) * inv_hw).astype(compute_dtype)
    b1_r = jnp.zeros((1, EMB_pad), f32).at[:, :emb].set(
        b1.astype(f32).reshape(1, emb))
    w2_t = jnp.zeros((EMB_pad, NC_pad), f32).at[:emb, :nc].set(
        jnp.transpose(w2).astype(f32)).astype(compute_dtype)
    b2_r = jnp.zeros((1, NC_pad), f32).at[:, :nc].set(
        b2.astype(f32).reshape(1, nc))

    grid = (N_pad // tile_n, hw_pad // hw_block)

    flops = (N_pad * C * hw_pad                      # pooling adds
             + 2 * N_pad * C * EMB_pad               # fc1
             + 2 * N_pad * EMB_pad * NC_pad)         # fc2
    bytes_accessed = (x3.size * x_itemsize
                      + (w1_t.size + w2_t.size) * w_itemsize
                      + (b1_r.size + b2_r.size) * 4
                      + (N_pad * EMB_pad + N_pad * NC_pad) * 4)

    kernel = functools.partial(_head_kernel, compute_dtype=compute_dtype)

    feat_p, out_p = pl.pallas_call(
        kernel,
        out_shape=(
            jax.ShapeDtypeStruct((N_pad, EMB_pad), jnp.float32),
            jax.ShapeDtypeStruct((N_pad, NC_pad), jnp.float32),
        ),
        grid=grid,
        in_specs=[
            # Streamed per (batch tile, hw chunk) in the input dtype.
            pl.BlockSpec((tile_n, C, hw_block), lambda i, j: (i, 0, j)),
            # Weights / biases: constant index maps -> fetched once, VMEM-resident
            # (counted double-buffered in the VMEM budget above).
            pl.BlockSpec((C, EMB_pad), lambda i, j: (0, 0)),
            pl.BlockSpec((1, EMB_pad), lambda i, j: (0, 0)),
            pl.BlockSpec((EMB_pad, NC_pad), lambda i, j: (0, 0)),
            pl.BlockSpec((1, NC_pad), lambda i, j: (0, 0)),
        ],
        out_specs=(
            pl.BlockSpec((tile_n, EMB_pad), lambda i, j: (i, 0)),
            pl.BlockSpec((tile_n, NC_pad), lambda i, j: (i, 0)),
        ),
        scratch_shapes=[pltpu.VMEM((tile_n, C), jnp.float32)],
        compiler_params=pltpu.CompilerParams(
            dimension_semantics=("parallel", "arbitrary"),
            vmem_limit_bytes=vmem_limit),
        cost_estimate=pl.CostEstimate(
            flops=flops, transcendentals=0, bytes_accessed=bytes_accessed),
    )(x3, w1_t, b1_r, w2_t, b2_r)

    return feat_p[:N, :emb], out_p[:N, :nc]


def _reference(x_nchw, w1, b1, w2, b2):
    pooled = jnp.mean(x_nchw.astype(jnp.float32), axis=(2, 3))   # (N, C)
    h = pooled @ w1.T + b1
    feature = jnp.maximum(h, 0.0)
    out = feature @ w2.T + b2
    return feature, out


if __name__ == "__main__":
    # Small shapes consistent with Net.forward:
    #   backbone feature map (N, fc_in_ch, H, W); embeddingdim; num_classes.
    N, C, H, W = 2, 32, 8, 8
    EMB, NUM_CLASSES = 64, 10

    key = jax.random.PRNGKey(0)
    kx, k1, k2, k3, k4 = jax.random.split(key, 5)

    x = jax.random.normal(kx, (N, C, H, W), dtype=jnp.float32)
    w1 = jax.random.normal(k1, (EMB, C), dtype=jnp.float32) * 0.05
    b1 = jax.random.normal(k2, (EMB,), dtype=jnp.float32) * 0.01
    w2 = jax.random.normal(k3, (NUM_CLASSES, EMB), dtype=jnp.float32) * 0.05
    b2 = jax.random.normal(k4, (NUM_CLASSES,), dtype=jnp.float32) * 0.01

    # float32 path: whole-batch tile, single hw block, no padding copies of x.
    feature, out = net_forward(x, w1, b1, w2, b2)
    jax.block_until_ready((feature, out))
    ref_feat, ref_out = _reference(x, w1, b1, w2, b2)
    assert feature.shape == (N, EMB) and out.shape == (N, NUM_CLASSES)
    assert jnp.allclose(feature, ref_feat, atol=5e-4, rtol=1e-3)
    assert jnp.allclose(out, ref_out, atol=5e-4, rtol=1e-3)

    # bf16 streaming path (backbone output dtype): bf16 weights / MXU operands,
    # pooling still accumulates in f32 inside the kernel.
    x_bf16 = x.astype(jnp.bfloat16)
    feature_b, out_b = net_forward(x_bf16, w1, b1, w2, b2)
    jax.block_until_ready((feature_b, out_b))
    ref_feat_b, ref_out_b = _reference(x_bf16.astype(jnp.float32), w1, b1, w2, b2)
    assert jnp.allclose(feature_b, ref_feat_b, atol=5e-3, rtol=5e-3)
    assert jnp.allclose(out_b, ref_out_b, atol=5e-3, rtol=5e-3)

    # Exercise the hw-reduction grid axis (grid_hw > 1) at small shape.
    x2 = jax.random.normal(kx, (N, C, 16, 16), dtype=jnp.float32)
    feature2, out2 = net_forward(x2, w1, b1, w2, b2, hw_block=128)
    jax.block_until_ready((feature2, out2))
    ref_feat2, ref_out2 = _reference(x2, w1, b1, w2, b2)
    assert jnp.allclose(feature2, ref_feat2, atol=5e-4, rtol=1e-3)
    assert jnp.allclose(out2, ref_out2, atol=5e-4, rtol=1e-3)

    print("KERNEL_OK")
</pallas_src>

<mosaic_0001>
module attributes {stable_mosaic.version = 11 : i64} {
  func.func @_head_kernel(%arg0: i32, %arg1: i32, %arg2: memref<2x32x64xf32, #tpu.memory_space<vmem>>, %arg3: memref<32x128xf32, #tpu.memory_space<vmem>>, %arg4: memref<1x128xf32, #tpu.memory_space<vmem>>, %arg5: memref<128x128xf32, #tpu.memory_space<vmem>>, %arg6: memref<1x128xf32, #tpu.memory_space<vmem>>, %arg7: memref<2x128xf32, #tpu.memory_space<vmem>>, %arg8: memref<2x128xf32, #tpu.memory_space<vmem>>, %arg9: memref<2x32xf32, #tpu.memory_space<vmem>>) attributes {dimension_semantics = [#tpu.dimension_semantics<parallel>, #tpu.dimension_semantics<arbitrary>], iteration_bounds = array<i64: 1, 1>, scalar_prefetch = 0 : i64, scratch_operands = 1 : i64, tpu.core_type = #tpu.core_type<tc>, window_params = [{transform_indices = @transform_0, window_bounds = array<i64: 2, 32, 64>}, {pipeline_mode = #tpu.pipeline_mode<synchronous>, transform_indices = @transform_1, window_bounds = array<i64: 32, 128>}, {pipeline_mode = #tpu.pipeline_mode<synchronous>, transform_indices = @transform_2, window_bounds = array<i64: 1, 128>}, {pipeline_mode = #tpu.pipeline_mode<synchronous>, transform_indices = @transform_3, window_bounds = array<i64: 128, 128>}, {pipeline_mode = #tpu.pipeline_mode<synchronous>, transform_indices = @transform_4, window_bounds = array<i64: 1, 128>}, {transform_indices = @transform_5, window_bounds = array<i64: 2, 128>}, {transform_indices = @transform_6, window_bounds = array<i64: 2, 128>}]} {
    %c0_i32 = arith.constant 0 : i32
    %0 = arith.cmpi eq, %arg1, %c0_i32 : i32
    %1 = arith.extui %0 : i1 to i32
    %c0_i32_0 = arith.constant 0 : i32
    %2 = arith.cmpi ne, %1, %c0_i32_0 : i32
    scf.if %2 {
      %cst_9 = arith.constant 0.000000e+00 : f32
      %11 = vector.broadcast %cst_9 : f32 to vector<2x32xf32>
      %c0_10 = arith.constant 0 : index
      %c0_11 = arith.constant 0 : index
      %12 = vector.load %arg9[%c0_10, %c0_11] : memref<2x32xf32, #tpu.memory_space<vmem>>, vector<2x32xf32>
      tpu.vector_store %arg9[%c0_10, %c0_11], %11 {strides = array<i32>} : memref<2x32xf32, #tpu.memory_space<vmem>>, vector<2x32xf32>,
    } else {
    }
    %c0 = arith.constant 0 : index
    %c0_1 = arith.constant 0 : index
    %3 = vector.load %arg9[%c0, %c0_1] : memref<2x32xf32, #tpu.memory_space<vmem>>, vector<2x32xf32>
    %c0_2 = arith.constant 0 : index
    %c0_3 = arith.constant 0 : index
    %c0_4 = arith.constant 0 : index
    %4 = vector.load %arg2[%c0_2, %c0_3, %c0_4] : memref<2x32x64xf32, #tpu.memory_space<vmem>>, vector<2x32x64xf32>
    %cst = arith.constant dense<0.000000e+00> : vector<2x32xf32>
    %5 = vector.multi_reduction <add>, %4, %cst [2] : vector<2x32x64xf32> to vector<2x32xf32>
    %6 = arith.addf %3, %5 : vector<2x32xf32>
    %c0_5 = arith.constant 0 : index
    %c0_6 = arith.constant 0 : index
    %7 = vector.load %arg9[%c0_5, %c0_6] : memref<2x32xf32, #tpu.memory_space<vmem>>, vector<2x32xf32>
    tpu.vector_store %arg9[%c0_5, %c0_6], %6 {strides = array<i32>} : memref<2x32xf32, #tpu.memory_space<vmem>>, vector<2x32xf32>,
    %c0_i32_7 = arith.constant 0 : i32
    %8 = arith.cmpi eq, %arg1, %c0_i32_7 : i32
    %9 = arith.extui %8 : i1 to i32
    %c0_i32_8 = arith.constant 0 : i32
    %10 = arith.cmpi ne, %9, %c0_i32_8 : i32
    scf.if %10 {
      %c0_9 = arith.constant 0 : index
      %c0_10 = arith.constant 0 : index
      %11 = vector.load %arg9[%c0_9, %c0_10] : memref<2x32xf32, #tpu.memory_space<vmem>>, vector<2x32xf32>
      %c0_11 = arith.constant 0 : index
      %c0_12 = arith.constant 0 : index
      %12 = vector.load %arg3[%c0_11, %c0_12] : memref<32x128xf32, #tpu.memory_space<vmem>>, vector<32x128xf32>
      %cst_13 = arith.constant dense<0.000000e+00> : vector<2x128xf32>
      %13 = tpu.matmul %11, %12, %cst_13 {dimension_numbers = #tpu.dot_dimension_numbers<[1], [0], [0], [1], [0, 0, 1, 1], [], []>} : vector<2x32xf32>, vector<32x128xf32>, vector<2x128xf32> -> vector<2x128xf32>
      %c0_14 = arith.constant 0 : index
      %c0_15 = arith.constant 0 : index
      %14 = vector.load %arg4[%c0_14, %c0_15] : memref<1x128xf32, #tpu.memory_space<vmem>>, vector<1x128xf32>
      %15 = vector.broadcast %14 : vector<1x128xf32> to vector<2x128xf32>
      %16 = arith.addf %13, %15 : vector<2x128xf32>
      %cst_16 = arith.constant 0.000000e+00 : f32
      %17 = vector.broadcast %cst_16 : f32 to vector<2x128xf32>
      %18 = arith.maximumf %16, %17 : vector<2x128xf32>
      %c0_17 = arith.constant 0 : index
      %c0_18 = arith.constant 0 : index
      %19 = vector.load %arg7[%c0_17, %c0_18] : memref<2x128xf32, #tpu.memory_space<vmem>>, vector<2x128xf32>
      tpu.vector_store %arg7[%c0_17, %c0_18], %18 {strides = array<i32>} : memref<2x128xf32, #tpu.memory_space<vmem>>, vector<2x128xf32>,
      %c0_19 = arith.constant 0 : index
      %c0_20 = arith.constant 0 : index
      %20 = vector.load %arg5[%c0_19, %c0_20] : memref<128x128xf32, #tpu.memory_space<vmem>>, vector<128x128xf32>
      %cst_21 = arith.constant dense<0.000000e+00> : vector<2x128xf32>
      %21 = tpu.matmul %18, %20, %cst_21 {dimension_numbers = #tpu.dot_dimension_numbers<[1], [0], [0], [1], [0, 0, 1, 1], [], []>} : vector<2x128xf32>, vector<128x128xf32>, vector<2x128xf32> -> vector<2x128xf32>
      %c0_22 = arith.constant 0 : index
      %c0_23 = arith.constant 0 : index
      %22 = vector.load %arg6[%c0_22, %c0_23] : memref<1x128xf32, #tpu.memory_space<vmem>>, vector<1x128xf32>
      %23 = vector.broadcast %22 : vector<1x128xf32> to vector<2x128xf32>
      %24 = arith.addf %21, %23 : vector<2x128xf32>
      %c0_24 = arith.constant 0 : index
      %c0_25 = arith.constant 0 : index
      %25 = vector.load %arg8[%c0_24, %c0_25] : memref<2x128xf32, #tpu.memory_space<vmem>>, vector<2x128xf32>
      tpu.vector_store %arg8[%c0_24, %c0_25], %24 {strides = array<i32>} : memref<2x128xf32, #tpu.memory_space<vmem>>, vector<2x128xf32>,
    } else {
    }
    return
  }
  func.func @transform_0(%arg0: i32, %arg1: i32) -> (i32, i32, i32) {
    %c0_i32 = arith.constant 0 : i32
    %c0_i32_0 = arith.constant 0 : i32
    return %arg0, %c0_i32, %arg1 : i32, i32, i32
  }
  func.func @transform_1(%arg0: i32, %arg1: i32) -> (i32, i32) {
    %c0_i32 = arith.constant 0 : i32
    %c0_i32_0 = arith.constant 0 : i32
    %c0_i32_1 = arith.constant 0 : i32
    return %c0_i32, %c0_i32_0 : i32, i32
  }
  func.func @transform_2(%arg0: i32, %arg1: i32) -> (i32, i32) {
    %c0_i32 = arith.constant 0 : i32
    %c0_i32_0 = arith.constant 0 : i32
    %c0_i32_1 = arith.constant 0 : i32
    return %c0_i32, %c0_i32_0 : i32, i32
  }
  func.func @transform_3(%arg0: i32, %arg1: i32) -> (i32, i32) {
    %c0_i32 = arith.constant 0 : i32
    %c0_i32_0 = arith.constant 0 : i32
    %c0_i32_1 = arith.constant 0 : i32
    return %c0_i32, %c0_i32_0 : i32, i32
  }
  func.func @transform_4(%arg0: i32, %arg1: i32) -> (i32, i32) {
    %c0_i32 = arith.constant 0 : i32
    %c0_i32_0 = arith.constant 0 : i32
    %c0_i32_1 = arith.constant 0 : i32
    return %c0_i32, %c0_i32_0 : i32, i32
  }
  func.func @transform_5(%arg0: i32, %arg1: i32) -> (i32, i32) {
    %c0_i32 = arith.constant 0 : i32
    %c0_i32_0 = arith.constant 0 : i32
    return %arg0, %c0_i32 : i32, i32
  }
  func.func @transform_6(%arg0: i32, %arg1: i32) -> (i32, i32) {
    %c0_i32 = arith.constant 0 : i32
    %c0_i32_0 = arith.constant 0 : i32
    return %arg0, %c0_i32 : i32, i32
  }
}

</mosaic_0001>

<llo_original>
// kernel: tpu_custom_call.1
$region0: #{tpu_custom_call.1}
  #allocation0 [shape = 'u32[]', space=smem, size = 0x4, offset = 0x4, fixed_abs, tag = 'smem constant byte address 0x4 - core index']
  #allocation1 [shape = 'u32[144,128]{1,0:T(1,128)}', space=vmem, size = 0x12000, scoped, tag = 'internal scratch']
  #allocation2 [shape = 'f32[2,32]{1,0:T(2,128)}', space=vmem, size = 0x400, scoped, tag = 'scratch operand']
  %s0 = inlined_call_operand.hbm [shape: f32[2,32,64], index: 0, kind: input, shape index: {}]
  %s1 = inlined_call_operand.hbm [shape: f32[32,128], index: 1, kind: input, shape index: {}]
  %s2 = inlined_call_operand.vmem [shape: f32[1,128], index: 2, kind: input, shape index: {}]
  %s3 = inlined_call_operand.hbm [shape: f32[128,128], index: 3, kind: input, shape index: {}]
  %s4 = inlined_call_operand.vmem [shape: f32[1,128], index: 4, kind: input, shape index: {}]
  %s5 = inlined_call_operand.hbm [shape: f32[2,128], index: 5, kind: output, shape index: {0}]
  %s6 = inlined_call_operand.hbm [shape: f32[2,128], index: 6, kind: output, shape index: {1}]
  %7 = xla_tuple %s5, %s6
  %s8 = sld [smem:[#allocation0]]
  $region58: #{tpu_custom_call.1} parent=0
    _
  %s10 = ssub.s32 1, %s8
  %s11 = scalar_select 0, %s10, %s8
  $region1: #{tpu_custom_call.1} parent=0
    #allocation3 [shape = 'u8[32768]{0}', space=vmem, size = 0x8000, scoped, tag = 'input window, operand 0, single buffered']
    #allocation4 [shape = 's32[1]{0}', space=sflag, size = 0x4, scoped, tag = 'scoped memory for tpu_custom_call.1']
    #allocation5 [shape = 's32[1]{0}', space=sflag, size = 0x4, scoped, tag = 'scoped memory for tpu_custom_call.1']
    #allocation6 [shape = 'u8[16384]{0}', space=vmem, size = 0x4000, scoped, tag = 'input window, operand 1, single buffered']
    #allocation7 [shape = 's32[1]{0}', space=sflag, size = 0x4, scoped, tag = 'scoped memory for tpu_custom_call.1']
    #allocation8 [shape = 'u8[65536]{0}', space=vmem, size = 0x10000, scoped, tag = 'input window, operand 3, single buffered']
    #allocation9 [shape = 'u8[1024]{0}', space=vmem, size = 0x400, scoped, tag = 'output window, operand 0, single buffered']
    #allocation10 [shape = 'u8[1024]{0}', space=vmem, size = 0x400, scoped, tag = 'output window, operand 1, single buffered']
    #allocation11 [shape = 's32[1]{0}', space=sflag, size = 0x4, scoped, tag = 'scoped memory for tpu_custom_call.1']
    %12 = vsyncpa [#allocation4], 0
    %13 = vsyncpa [#allocation7], 0
    %14 = vsyncpa [#allocation5], 0
    %15 = vsyncpa [#allocation11], 0
    // Predicated region
    $region2: #{tpu_custom_call.1} parent=1 // pred_check
      _
    $region3: #{tpu_custom_call.1} parent=1 // pred_check_branch
      %17 = sbr.rel (0) target = $region5
    $region4: #{tpu_custom_call.1} parent=1 // pred_region
      %s19 = ssub.s32 1024, 1024
      %20 = vsyncadd [#allocation4], %s19
      %s21 = sshll.u32 [#allocation3], 4
      %s22 = int_to_ptr.vmem [resolvable:$true] %s21
      %27 = dma.hbm_to_vmem [thread:$0]  %s0, 1024, %s22, [#allocation4], 128, 128, 8
    $region5: #{tpu_custom_call.1} parent=1 // pred_fallthru
      _
    // Predicated region
    $region6: #{tpu_custom_call.1} parent=1 // pred_check
      _
    $region7: #{tpu_custom_call.1} parent=1 // pred_check_branch
      %29 = sbr.rel (0) target = $region9
    $region8: #{tpu_custom_call.1} parent=1 // pred_region
      %s31 = ssub.s32 512, 512
      %32 = vsyncadd [#allocation7], %s31
      %s33 = sshll.u32 [#allocation6], 4
      %s34 = int_to_ptr.vmem [resolvable:$true] %s33
      %39 = dma.hbm_to_vmem [thread:$0]  %s1, 512, %s34, [#allocation7], 128, 128, 8
    $region9: #{tpu_custom_call.1} parent=1 // pred_fallthru
      _
    // Predicated region
    $region10: #{tpu_custom_call.1} parent=1 // pred_check
      _
    $region11: #{tpu_custom_call.1} parent=1 // pred_check_branch
      %41 = sbr.rel (0) target = $region13
    $region12: #{tpu_custom_call.1} parent=1 // pred_region
      _
    $region13: #{tpu_custom_call.1} parent=1 // pred_fallthru
      _
    // Predicated region
    $region14: #{tpu_custom_call.1} parent=1 // pred_check
      _
    $region15: #{tpu_custom_call.1} parent=1 // pred_check_branch
      %43 = sbr.rel (0) target = $region17
    $region16: #{tpu_custom_call.1} parent=1 // pred_region
      %s45 = ssub.s32 2048, 2048
      %46 = vsyncadd [#allocation7], %s45
      %s47 = sshll.u32 [#allocation8], 4
      %s48 = int_to_ptr.vmem [resolvable:$true] %s47
      %53 = dma.hbm_to_vmem [thread:$0]  %s3, 2048, %s48, [#allocation7], 128, 128, 8
    $region17: #{tpu_custom_call.1} parent=1 // pred_fallthru
      _
    // Predicated region
    $region18: #{tpu_custom_call.1} parent=1 // pred_check
      _
    $region19: #{tpu_custom_call.1} parent=1 // pred_check_branch
      %55 = sbr.rel (0) target = $region21
    $region20: #{tpu_custom_call.1} parent=1 // pred_region
      _
    $region21: #{tpu_custom_call.1} parent=1 // pred_fallthru
      _
    // Predicated region
    $region22: #{tpu_custom_call.1} parent=1 // pred_check
      _
    $region23: #{tpu_custom_call.1} parent=1 // pred_check_branch
      %57 = sbr.rel (0) target = $region25
    $region24: #{tpu_custom_call.1} parent=1 // pred_region
      %58 = dma.done [#allocation4], 1024
    $region25: #{tpu_custom_call.1} parent=1 // pred_fallthru
      _
    // Predicated region
    $region26: #{tpu_custom_call.1} parent=1 // pred_check
      _
    $region27: #{tpu_custom_call.1} parent=1 // pred_check_branch
      %60 = sbr.rel (0) target = $region29
    $region28: #{tpu_custom_call.1} parent=1 // pred_region
      %61 = dma.done [#allocation7], 512
    $region29: #{tpu_custom_call.1} parent=1 // pred_fallthru
      _
    // Predicated region
    $region30: #{tpu_custom_call.1} parent=1 // pred_check
      _
    $region31: #{tpu_custom_call.1} parent=1 // pred_check_branch
      %63 = sbr.rel (0) target = $region33
    $region32: #{tpu_custom_call.1} parent=1 // pred_region
      %64 = dma.done [#allocation7], 2048
    $region33: #{tpu_custom_call.1} parent=1 // pred_fallthru
      _
    %p65 = scmp.eq.s32.totalorder 0, 0
    // Predicated region
    $region34: #{tpu_custom_call.1} parent=1 // pred_check
      %p66 = pneg %p65
    $region35: #{tpu_custom_call.1} parent=1 // pred_check_branch
      %68 = sbr.rel (%p66) target = $region37
    $region36: #{tpu_custom_call.1} parent=1 // pred_region
      %vm69 = vcmask 254976
      %70 = vst.msk [vmem:[#allocation2] sm:$0x3] %vm69, 0.0
    $region37: #{tpu_custom_call.1} parent=1 // pred_fallthru
      _
    %v71 = vld [vmem:[#allocation2] sm:$0x3]
    %v72 = vld [vmem:[#allocation3] sm:$0xff]
    %v73 = vld [vmem:[#allocation3 + $0x8] sm:$0xff]
    %v74 = vld [vmem:[#allocation3 + $0x10] sm:$0xff]
    %v75 = vld [vmem:[#allocation3 + $0x18] sm:$0xff]
    %v76 = vld [vmem:[#allocation3 + $0x20] sm:$0xff]
    %v77 = vld [vmem:[#allocation3 + $0x28] sm:$0xff]
    %v78 = vld [vmem:[#allocation3 + $0x30] sm:$0xff]
    %v79 = vld [vmem:[#allocation3 + $0x38] sm:$0xff]
    %vm80 = vcmask 523264
    %v81 = vsel %vm80, %v72, 0.0
    %82 = vadd.xlane.f32.xlu0 %v81
    %v83 = vpop.xlane.xlu0 %82
    %v84 = vsel %vm80, %v73, 0.0
    %85 = vadd.xlane.f32.xlu0 %v84
    %v86 = vpop.xlane.xlu0 %85
    %v87 = vsel %vm80, %v74, 0.0
    %88 = vadd.xlane.f32.xlu0 %v87
    %v89 = vpop.xlane.xlu0 %88
    %v90 = vsel %vm80, %v75, 0.0
    %91 = vadd.xlane.f32.xlu0 %v90
    %v92 = vpop.xlane.xlu0 %91
    %v93 = vsel %vm80, %v76, 0.0
    %94 = vadd.xlane.f32.xlu0 %v93
    %v95 = vpop.xlane.xlu0 %94
    %v96 = vsel %vm80, %v77, 0.0
    %97 = vadd.xlane.f32.xlu0 %v96
    %v98 = vpop.xlane.xlu0 %97
    %v99 = vsel %vm80, %v78, 0.0
    %100 = vadd.xlane.f32.xlu0 %v99
    %v101 = vpop.xlane.xlu0 %100
    %v102 = vsel %vm80, %v79, 0.0
    %103 = vadd.xlane.f32.xlu0 %v102
    %v104 = vpop.xlane.xlu0 %103
    %v113 = vlaneseq
    %v114 = vand.u32 %v113, 127
    %v115 = vlaneseq
    %v116 = vshrl.u32 %v115, 7
    %v117 = vsub.s32 %v114, %v116
    %v118 = vrot.slane %v83, %v117
    %v119 = vadd.s32 %v114, 4294967288
    %v120 = vlaneseq
    %v121 = vshrl.u32 %v120, 7
    %v122 = vsub.s32 %v119, %v121
    %v123 = vrot.slane %v86, %v122
    %vm124 = vcmask 130112
    %v125 = vsel %vm124, %v123, %v118
    %v126 = vadd.s32 %v114, 4294967280
    %v127 = vlaneseq
    %v128 = vshrl.u32 %v127, 7
    %v129 = vsub.s32 %v126, %v128
    %v130 = vrot.slane %v89, %v129
    %vm131 = vcmask 195712
    %v132 = vsel %vm131, %v130, %v125
    %v133 = vadd.s32 %v114, 4294967272
    %v134 = vlaneseq
    %v135 = vshrl.u32 %v134, 7
    %v136 = vsub.s32 %v133, %v135
    %v137 = vrot.slane %v92, %v136
    %vm138 = vcmask 261312
    %v139 = vsel %vm138, %v137, %v132
    %v140 = vlaneseq
    %v141 = vshrl.u32 %v140, 7
    %v142 = vsub.s32 %v114, %v141
    %v143 = vrot.slane %v95, %v142
    %v144 = vlaneseq
    %v145 = vshrl.u32 %v144, 7
    %v146 = vsub.s32 %v119, %v145
    %v147 = vrot.slane %v98, %v146
    %v148 = vsel %vm124, %v147, %v143
    %v149 = vlaneseq
    %v150 = vshrl.u32 %v149, 7
    %v151 = vsub.s32 %v126, %v150
    %v152 = vrot.slane %v101, %v151
    %v153 = vsel %vm131, %v152, %v148
    %v154 = vlaneseq
    %v155 = vshrl.u32 %v154, 7
    %v156 = vsub.s32 %v133, %v155
    %v157 = vrot.slane %v104, %v156
    %v158 = vsel %vm138, %v157, %v153
    %vm159 = vcmask 1041409
    %v160 = vsel %vm159, %v158, %v139
    %v162 = vadd.f32 %v71, %v160
    %vm163 = vcmask 254976
    %164 = vst.msk [vmem:[#allocation2] sm:$0x3] %vm163, %v162
    // Predicated region
    $region38: #{tpu_custom_call.1} parent=1 // pred_check
      %p165 = pneg %p65
    $region39: #{tpu_custom_call.1} parent=1 // pred_check_branch
      %167 = sbr.rel (%p165) target = $region41
    $region40: #{tpu_custom_call.1} parent=1 // pred_region
      %v168 = vld [vmem:[#allocation2] sm:$0x3]
      %v169 = vld [vmem:[#allocation6] sm:$0xff]
      %v170 = vld [vmem:[#allocation6 + $0x8] sm:$0xff]
      %v171 = vld [vmem:[#allocation6 + $0x10] sm:$0xff]
      %v172 = vld [vmem:[#allocation6 + $0x18] sm:$0xff]
      %v173 = vld [vmem:[%s2] sm:$0x1]
      %v175 = vlaneseq
      %v176 = vshrl.u32 %v175, 7
      %v177 = vsub.s32 0, %v176
      %v178 = vrot.slane %v173, %v177
      %vm180 = vcmask 261120
      %v182 = vsel %vm180, %v168, 0
      %184 = vmatprep.subr.mxu0 0.0
      %185 = vmatpush1.msra.mxu0 0.0
      %186 = vmatprep.subr.mxu0 0.0
      %187 = vmatpush1.msra.mxu0 0.0
      %188 = vmatprep.subr.mxu0 0.0
      %189 = vmatpush1.msra.mxu0 0.0
      %190 = vmatprep.subr.mxu0 0.0
      %191 = vmatpush1.msra.mxu0 0.0
      %192 = vmatprep.subr.mxu0 0.0
      %193 = vmatpush1.msra.mxu0 0.0
      %194 = vmatprep.subr.mxu0 0.0
      %195 = vmatpush1.msra.mxu0 0.0
      %196 = vmatprep.subr.mxu0 0.0
      %197 = vmatpush1.msra.mxu0 0.0
      %198 = vmatprep.subr.mxu0 0.0
      %199 = vmatpush1.msra.mxu0 0.0
      %200 = vmatprep.subr.mxu0 0.0
      %201 = vmatpush1.msra.mxu0 0.0
      %202 = vmatprep.subr.mxu0 0.0
      %203 = vmatpush1.msra.mxu0 0.0
      %204 = vmatprep.subr.mxu0 0.0
      %205 = vmatpush1.msra.mxu0 0.0
      %206 = vmatprep.subr.mxu0 0.0
      %207 = vmatpush1.msra.mxu0 0.0
      %208 = vmatprep.subr.mxu0 0.0
      %209 = vmatpush1.msra.mxu0 %v172
      %210 = vmatprep.subr.mxu0 0.0
      %211 = vmatpush1.msra.mxu0 %v171
      %212 = vmatprep.subr.mxu0 0.0
      %213 = vmatpush1.msra.mxu0 %v170
      %214 = vmatprep.subr.mxu0 0.0
      %215 = vmatpush1.msra.mxu0 %v169
      %216 = vmatprep.subr.mxu0 0.0
      %217 = vmatpush2.msra.mxu0 0.0
      %218 = vmatprep.subr.mxu0 0.0
      %219 = vmatpush2.msra.mxu0 0.0
      %220 = vmatprep.subr.mxu0 0.0
      %221 = vmatpush2.msra.mxu0 0.0
      %222 = vmatprep.subr.mxu0 0.0
      %223 = vmatpush2.msra.mxu0 0.0
      %224 = vmatprep.subr.mxu0 0.0
      %225 = vmatpush2.msra.mxu0 0.0
      %226 = vmatprep.subr.mxu0 0.0
      %227 = vmatpush2.msra.mxu0 0.0
      %228 = vmatprep.subr.mxu0 0.0
      %229 = vmatpush2.msra.mxu0 0.0
      %230 = vmatprep.subr.mxu0 0.0
      %231 = vmatpush2.msra.mxu0 0.0
      %232 = vmatprep.subr.mxu0 0.0
      %233 = vmatpush2.msra.mxu0 0.0
      %234 = vmatprep.subr.mxu0 0.0
      %235 = vmatpush2.msra.mxu0 0.0
      %236 = vmatprep.subr.mxu0 0.0
      %237 = vmatpush2.msra.mxu0 0.0
      %238 = vmatprep.subr.mxu0 0.0
      %239 = vmatpush2.msra.mxu0 0.0
      %240 = vmatprep.subr.mxu0 0.0
      %241 = vmatpush2.msra.mxu0 0.0
      %242 = vmatprep.subr.mxu0 0.0
      %243 = vmatpush2.msra.mxu0 0.0
      %244 = vmatprep.subr.mxu0 0.0
      %245 = vmatpush2.msra.mxu0 0.0
      %246 = vmatprep.subr.mxu0 0.0
      %247 = vmatpush2.msra.mxu0 0.0
      %248 = vmatprep.mubr.f32.mxu0 0.0
      %249 = vmatmul.mubr.f32.gmra.mxu0 %v182
      %v250 = vpop.f32.mrf.mxu0
      %v251 = vadd.f32 %v178, %v250
      %v252 = vpop.f32.mrf.mxu0
      %253 = vdwg.mxu0
      %v254 = vmax.f32 %v251, 0.0
      %255 = vst [vmem:[#allocation9] sm:$0x3] %v254
      %v256 = vld [vmem:[#allocation8] sm:$0xff]
      %v257 = vld [vmem:[#allocation8 + $0x8] sm:$0xff]
      %v258 = vld [vmem:[#allocation8 + $0x10] sm:$0xff]
      %v259 = vld [vmem:[#allocation8 + $0x18] sm:$0xff]
      %v260 = vld [vmem:[#allocation8 + $0x20] sm:$0xff]
      %v261 = vld [vmem:[#allocation8 + $0x28] sm:$0xff]
      %v262 = vld [vmem:[#allocation8 + $0x30] sm:$0xff]
      %v263 = vld [vmem:[#allocation8 + $0x38] sm:$0xff]
      %v264 = vld [vmem:[#allocation8 + $0x40] sm:$0xff]
      %v265 = vld [vmem:[#allocation8 + $0x48] sm:$0xff]
      %v266 = vld [vmem:[#allocation8 + $0x50] sm:$0xff]
      %v267 = vld [vmem:[#allocation8 + $0x58] sm:$0xff]
      %v268 = vld [vmem:[#allocation8 + $0x60] sm:$0xff]
      %v269 = vld [vmem:[#allocation8 + $0x68] sm:$0xff]
      %v270 = vld [vmem:[#allocation8 + $0x70] sm:$0xff]
      %v271 = vld [vmem:[#allocation8 + $0x78] sm:$0xff]
      %v272 = vld [vmem:[%s4] sm:$0x1]
      %v274 = vlaneseq
      %v275 = vshrl.u32 %v274, 7
      %v276 = vsub.s32 0, %v275
      %v277 = vrot.slane %v272, %v276
      %279 = vmatprep.subr.mxu0 0.0
      %280 = vmatpush1.msra.mxu0 %v271
      %281 = vmatprep.subr.mxu0 0.0
      %282 = vmatpush1.msra.mxu0 %v270
      %283 = vmatprep.subr.mxu0 0.0
      %284 = vmatpush1.msra.mxu0 %v269
      %285 = vmatprep.subr.mxu0 0.0
      %286 = vmatpush1.msra.mxu0 %v268
      %287 = vmatprep.subr.mxu0 0.0
      %288 = vmatpush1.msra.mxu0 %v267
      %289 = vmatprep.subr.mxu0 0.0
      %290 = vmatpush1.msra.mxu0 %v266
      %291 = vmatprep.subr.mxu0 0.0
      %292 = vmatpush1.msra.mxu0 %v265
      %293 = vmatprep.subr.mxu0 0.0
      %294 = vmatpush1.msra.mxu0 %v264
      %295 = vmatprep.subr.mxu0 0.0
      %296 = vmatpush1.msra.mxu0 %v263
      %297 = vmatprep.subr.mxu0 0.0
      %298 = vmatpush1.msra.mxu0 %v262
      %299 = vmatprep.subr.mxu0 0.0
      %300 = vmatpush1.msra.mxu0 %v261
      %301 = vmatprep.subr.mxu0 0.0
      %302 = vmatpush1.msra.mxu0 %v260
      %303 = vmatprep.subr.mxu0 0.0
      %304 = vmatpush1.msra.mxu0 %v259
      %305 = vmatprep.subr.mxu0 0.0
      %306 = vmatpush1.msra.mxu0 %v258
      %307 = vmatprep.subr.mxu0 0.0
      %308 = vmatpush1.msra.mxu0 %v257
      %309 = vmatprep.subr.mxu0 0.0
      %310 = vmatpush1.msra.mxu0 %v256
      %311 = vmatprep.subr.mxu0 0.0
      %312 = vmatpush2.msra.mxu0 0.0
      %313 = vmatprep.subr.mxu0 0.0
      %314 = vmatpush2.msra.mxu0 0.0
      %315 = vmatprep.subr.mxu0 0.0
      %316 = vmatpush2.msra.mxu0 0.0
      %317 = vmatprep.subr.mxu0 0.0
      %318 = vmatpush2.msra.mxu0 0.0
      %319 = vmatprep.subr.mxu0 0.0
      %320 = vmatpush2.msra.mxu0 0.0
      %321 = vmatprep.subr.mxu0 0.0
      %322 = vmatpush2.msra.mxu0 0.0
      %323 = vmatprep.subr.mxu0 0.0
      %324 = vmatpush2.msra.mxu0 0.0
      %325 = vmatprep.subr.mxu0 0.0
      %326 = vmatpush2.msra.mxu0 0.0
      %327 = vmatprep.subr.mxu0 0.0
      %328 = vmatpush2.msra.mxu0 0.0
      %329 = vmatprep.subr.mxu0 0.0
      %330 = vmatpush2.msra.mxu0 0.0
      %331 = vmatprep.subr.mxu0 0.0
      %332 = vmatpush2.msra.mxu0 0.0
      %333 = vmatprep.subr.mxu0 0.0
      %334 = vmatpush2.msra.mxu0 0.0
      %335 = vmatprep.subr.mxu0 0.0
      %336 = vmatpush2.msra.mxu0 0.0
      %337 = vmatprep.subr.mxu0 0.0
      %338 = vmatpush2.msra.mxu0 0.0
      %339 = vmatprep.subr.mxu0 0.0
      %340 = vmatpush2.msra.mxu0 0.0
      %341 = vmatprep.subr.mxu0 0.0
      %342 = vmatpush2.msra.mxu0 0.0
      %343 = vmatprep.mubr.f32.mxu0 0.0
      %344 = vmatmul.mubr.f32.gmra.mxu0 %v254
      %v345 = vpop.f32.mrf.mxu0
      %v346 = vadd.f32 %v277, %v345
      %v347 = vpop.f32.mrf.mxu0
      %348 = vdwg.mxu0
      %349 = vst [vmem:[#allocation10] sm:$0x3] %v346
    $region41: #{tpu_custom_call.1} parent=1 // pred_fallthru
      _
    // Predicated region
    $region42: #{tpu_custom_call.1} parent=1 // pred_check
      _
    $region43: #{tpu_custom_call.1} parent=1 // pred_check_branch
      %351 = sbr.rel (0) target = $region45
    $region44: #{tpu_custom_call.1} parent=1 // pred_region
      %s353 = ssub.s32 32, 32
      %354 = vsyncadd [#allocation5], %s353
      %s356 = sshll.u32 [#allocation9], 4
      %s357 = int_to_ptr.vmem [resolvable:$true] %s356
      %359 = dma.vmem_to_hbm [thread:$0]  %s357, 32, %s5, [#allocation5]
    $region45: #{tpu_custom_call.1} parent=1 // pred_fallthru
      _
    // Predicated region
    $region46: #{tpu_custom_call.1} parent=1 // pred_check
      _
    $region47: #{tpu_custom_call.1} parent=1 // pred_check_branch
      %361 = sbr.rel (0) target = $region49
    $region48: #{tpu_custom_call.1} parent=1 // pred_region
      %s363 = ssub.s32 32, 32
      %364 = vsyncadd [#allocation11], %s363
      %s366 = sshll.u32 [#allocation10], 4
      %s367 = int_to_ptr.vmem [resolvable:$true] %s366
      %369 = dma.vmem_to_hbm [thread:$0]  %s367, 32, %s6, [#allocation11]
    $region49: #{tpu_custom_call.1} parent=1 // pred_fallthru
      _
    // Predicated region
    $region50: #{tpu_custom_call.1} parent=1 // pred_check
      _
    $region51: #{tpu_custom_call.1} parent=1 // pred_check_branch
      %371 = sbr.rel (0) target = $region53
    $region52: #{tpu_custom_call.1} parent=1 // pred_region
      %372 = dma.done [#allocation5], 32
    $region53: #{tpu_custom_call.1} parent=1 // pred_fallthru
      _
    // Predicated region
    $region54: #{tpu_custom_call.1} parent=1 // pred_check
      _
    $region55: #{tpu_custom_call.1} parent=1 // pred_check_branch
      %374 = sbr.rel (0) target = $region57
    $region56: #{tpu_custom_call.1} parent=1 // pred_region
      %375 = dma.done [#allocation11], 32
    $region57: #{tpu_custom_call.1} parent=1 // pred_fallthru
      _
    %376 = vsyncpa [#allocation4], 1
    %377 = vsyncpa [#allocation7], 1
    %378 = vsyncpa [#allocation5], 1
    %379 = vsyncpa [#allocation11], 1

</llo_original>
